<compile_context>
chip_gen: v7x
topology: tpu7x:2x2x1
jax: 0.10.0
libtpu: 0.0.40
codegen_flags: <defaults>
</compile_context>

<pallas_src>
import functools

import jax
import jax.numpy as jnp
from jax import lax
from jax.experimental import pallas as pl
from jax.experimental.pallas import tpu as pltpu

_NEG = -1e30   # finite stand-in for -inf in the maxpool.  Safe only because
               # the preceding ReLU guarantees every 3x3 window contains a
               # value >= 0, so the sentinel can never win the max (and it is
               # never multiplied by anything, so no 0*inf hazards).
_EPS = 1e-5    # nn.LayerNorm default eps


def _block_kernel(idx_ref, xph_ref, gph_ref, bph_ref, avg_ref, wm_ref,
                  bias_ref, o_ref, *, C, H2, W2):
    L = o_ref.shape[1]       # lanes in this block = NB * H2 * W2

    ii = idx_ref[0:1, :]     # (1, L) int32: pooled row index of each lane
    jj = idx_ref[1:2, :]     # (1, L) int32: pooled col index of each lane

    x = xph_ref[...]         # (4*C, L) f32, rows = (phase_a*2 + phase_b)*C + c
    g = gph_ref[...]
    b = bph_ref[...]
    avg = avg_ref[...]       # (L, L): 1/(C*H*W) for same-sample lane pairs

    # ---------------- LayerNorm over (C, H, W) per sample + ReLU --------------
    # Segment mean, broadcast back to every lane of its sample, in one MXU
    # matmul against the block-diagonal averaging matrix (two-pass variance).
    mean_vec = jnp.sum(jnp.dot(x, avg, preferred_element_type=jnp.float32),
                       axis=0, keepdims=True)                     # (1, L)
    xc = x - mean_vec
    var_vec = jnp.sum(jnp.dot(xc * xc, avg, preferred_element_type=jnp.float32),
                      axis=0, keepdims=True)                      # (1, L)
    y = xc * lax.rsqrt(var_vec + _EPS) * g + b
    y = jnp.maximum(y, 0.0)                                       # (4*C, L)

    # ---------------- MaxPool2d(kernel=3, stride=2, padding=1) ----------------
    # Phase slabs: P_ab[c, nb*P + i*W2 + j] = relu(ln(x))[n, c, 2i+a, 2j+b]
    P00 = y[0 * C:1 * C, :]
    P01 = y[1 * C:2 * C, :]
    P10 = y[2 * C:3 * C, :]
    P11 = y[3 * C:4 * C, :]

    i0 = ii == 0
    j0 = jj == 0
    iL = ii == (H2 - 1)
    jL = jj == (W2 - 1)

    def shift(v, s, fill):
        # result[:, l] = v[:, l - s]; lanes shifted in get `fill`.  Any lane
        # that would pick up data across a row / sample boundary is masked by
        # the caller via the i0/j0/iL/jL masks.
        if s == 0:
            return v
        rows = v.shape[0]
        if s > 0:
            pad = jnp.full((rows, s), fill, v.dtype)
            return jnp.concatenate([pad, v[:, :L - s]], axis=1)
        s = -s
        pad = jnp.full((rows, s), fill, v.dtype)
        return jnp.concatenate([v[:, s:], pad], axis=1)

    # pooled[i, j] = max over input rows {2i-1, 2i, 2i+1} x cols {2j-1, 2j, 2j+1}
    a_ = jnp.maximum(jnp.maximum(P00, P01), jnp.maximum(P10, P11))           # (i  , j  )
    b_ = jnp.where(j0, _NEG, shift(jnp.maximum(P01, P11), 1, _NEG))          # (i  , j-1)
    c_ = jnp.where(i0, _NEG, shift(jnp.maximum(P10, P11), W2, _NEG))         # (i-1, j  )
    d_ = jnp.where(jnp.logical_or(i0, j0), _NEG, shift(P11, W2 + 1, _NEG))   # (i-1, j-1)
    pooled = jnp.maximum(jnp.maximum(a_, b_), jnp.maximum(c_, d_))           # (C, L)

    # ---------------- Conv2d(C -> C_out, kernel=3, padding=1) -----------------
    # im2col: 9 shifted / zero-masked copies of the pooled slab stacked into a
    # (9*C, L) patch matrix, then a single MXU matmul against (C_out, 9*C).
    taps = []
    for di in (-1, 0, 1):
        for dj in (-1, 0, 1):
            t = shift(pooled, -(di * W2 + dj), 0.0)
            if di == -1:
                t = jnp.where(i0, 0.0, t)
            elif di == 1:
                t = jnp.where(iL, 0.0, t)
            if dj == -1:
                t = jnp.where(j0, 0.0, t)
            elif dj == 1:
                t = jnp.where(jL, 0.0, t)
            taps.append(t)
    patches = jnp.concatenate(taps, axis=0)                          # (9*C, L)
    acc = jnp.dot(wm_ref[...], patches,
                  preferred_element_type=jnp.float32)                # (C_out, L)
    o_ref[...] = (acc + bias_ref[...]).astype(o_ref.dtype)           # lane-dense store


def downsample_conv_block(x, gamma, beta, weight, bias, *, batch_block=None):
    N, C, H, W = x.shape
    C_out = weight.shape[0]
    assert H % 2 == 0 and W % 2 == 0, "even spatial dims expected"
    # TODO(synk): odd H/W (pool windows straddling a ragged edge) would need an
    # extra padded phase; the discriminator only uses even spatial sizes.
    H2, W2 = H // 2, W // 2
    P = H2 * W2

    NB = N if batch_block is None else batch_block
    assert N % NB == 0
    L = NB * P

    f32 = jnp.float32
    x = x.astype(f32)
    gamma = gamma.astype(f32)
    beta = beta.astype(f32)
    weight = weight.astype(f32)
    bias = bias.astype(f32)

    # ---- lane-dense phase layout (pure reshape/transpose plumbing) ----------
    #   rows  = (a*2 + b)*C + c          lanes = n*P + i*W2 + j
    xph = (x.reshape(N, C, H2, 2, W2, 2)
             .transpose(3, 5, 1, 0, 2, 4)
             .reshape(4 * C, N * P))
    gph = (gamma.reshape(C, H2, 2, W2, 2)
                .transpose(2, 4, 0, 1, 3)
                .reshape(4 * C, 1, P))
    gph = jnp.broadcast_to(gph, (4 * C, NB, P)).reshape(4 * C, L)
    bph = (beta.reshape(C, H2, 2, W2, 2)
               .transpose(2, 4, 0, 1, 3)
               .reshape(4 * C, 1, P))
    bph = jnp.broadcast_to(bph, (4 * C, NB, P)).reshape(4 * C, L)

    # conv weight as a VMEM matmul operand; column = (ki*3 + kj)*C + c
    wm = weight.transpose(0, 2, 3, 1).reshape(C_out, 9 * C)
    bias2 = bias.reshape(C_out, 1)

    # lane -> (pooled row, pooled col) indices for the boundary masks
    lane = jnp.arange(L, dtype=jnp.int32)
    idx = jnp.stack([(lane % P) // W2, lane % W2], axis=0)           # (2, L)

    # block-diagonal averaging matrix: same-sample lane pairs -> 1/(C*H*W)
    same = (lane[:, None] // P) == (lane[None, :] // P)
    avg_mat = jnp.where(same, 1.0 / float(C * H * W), 0.0).astype(f32)  # (L, L)

    kernel = functools.partial(_block_kernel, C=C, H2=H2, W2=W2)

    out2d = pl.pallas_call(
        kernel,
        out_shape=jax.ShapeDtypeStruct((C_out, N * P), f32),
        grid_spec=pltpu.PrefetchScalarGridSpec(
            num_scalar_prefetch=0,
            grid=(N // NB,),
            in_specs=[
                pl.BlockSpec((2, L), lambda g: (0, 0)),              # lane indices
                pl.BlockSpec((4 * C, L), lambda g: (0, g)),          # x (phase layout)
                pl.BlockSpec((4 * C, L), lambda g: (0, 0)),          # gamma
                pl.BlockSpec((4 * C, L), lambda g: (0, 0)),          # beta
                pl.BlockSpec((L, L), lambda g: (0, 0)),              # averaging matrix
                pl.BlockSpec((C_out, 9 * C), lambda g: (0, 0)),      # conv weight (VMEM)
                pl.BlockSpec((C_out, 1), lambda g: (0, 0)),          # conv bias (VMEM)
            ],
            out_specs=pl.BlockSpec((C_out, L), lambda g: (0, g)),
        ),
        compiler_params=pltpu.CompilerParams(
            dimension_semantics=("parallel",)),
    )(idx, xph, gph, bph, avg_mat, wm, bias2)

    # lane-dense (C_out, N*H2*W2) -> NCHW
    return out2d.reshape(C_out, N, H2, W2).transpose(1, 0, 2, 3)


def reference(x, gamma, beta, weight, bias):
    """Pure-JAX reference matching the PyTorch module."""
    mean = jnp.mean(x, axis=(1, 2, 3), keepdims=True)
    var = jnp.mean((x - mean) ** 2, axis=(1, 2, 3), keepdims=True)
    y = (x - mean) * lax.rsqrt(var + _EPS) * gamma[None] + beta[None]
    y = jnp.maximum(y, 0.0)
    p = lax.reduce_window(y, -jnp.inf, lax.max,
                          window_dimensions=(1, 1, 3, 3),
                          window_strides=(1, 1, 2, 2),
                          padding=((0, 0), (0, 0), (1, 1), (1, 1)))
    out = lax.conv_general_dilated(p, weight, window_strides=(1, 1),
                                   padding=((1, 1), (1, 1)),
                                   dimension_numbers=("NCHW", "OIHW", "NCHW"))
    return out + bias[None, :, None, None]


if __name__ == "__main__":
    key = jax.random.PRNGKey(0)
    k1, k2, k3, k4, k5 = jax.random.split(key, 5)

    # input_size = (C, H, W) = (4, 16, 16); output_size[0] = C_out = 8
    N, C, H, W = 2, 4, 16, 16
    C_out = 8

    x = jax.random.normal(k1, (N, C, H, W), jnp.float32)
    gamma = 1.0 + 0.1 * jax.random.normal(k2, (C, H, W), jnp.float32)
    beta = 0.1 * jax.random.normal(k3, (C, H, W), jnp.float32)
    weight = 0.1 * jax.random.normal(k4, (C_out, C, 3, 3), jnp.float32)
    bias = 0.1 * jax.random.normal(k5, (C_out,), jnp.float32)

    out = downsample_conv_block(x, gamma, beta, weight, bias)
    out = jax.block_until_ready(out)

    ref = reference(x, gamma, beta, weight, bias)
    assert out.shape == ref.shape, (out.shape, ref.shape)
    max_err = float(jnp.max(jnp.abs(out - ref)))
    assert jnp.allclose(out, ref, atol=1e-4, rtol=1e-4), f"max abs err {max_err}"

    print("KERNEL_OK")
</pallas_src>

<mosaic_0001>
module attributes {stable_mosaic.version = 11 : i64} {
  func.func @_block_kernel(%arg0: i32, %arg1: memref<2x128xi32, #tpu.memory_space<vmem>>, %arg2: memref<16x128xf32, #tpu.memory_space<vmem>>, %arg3: memref<16x128xf32, #tpu.memory_space<vmem>>, %arg4: memref<16x128xf32, #tpu.memory_space<vmem>>, %arg5: memref<128x128xf32, #tpu.memory_space<vmem>>, %arg6: memref<8x36xf32, #tpu.memory_space<vmem>>, %arg7: memref<8x1xf32, #tpu.memory_space<vmem>>, %arg8: memref<8x128xf32, #tpu.memory_space<vmem>>) attributes {dimension_semantics = [#tpu.dimension_semantics<parallel>], iteration_bounds = array<i64: 1>, scalar_prefetch = 0 : i64, scratch_operands = 0 : i64, tpu.core_type = #tpu.core_type<tc>, window_params = [{pipeline_mode = #tpu.pipeline_mode<synchronous>, transform_indices = @transform_0, window_bounds = array<i64: 2, 128>}, {transform_indices = @transform_1, window_bounds = array<i64: 16, 128>}, {pipeline_mode = #tpu.pipeline_mode<synchronous>, transform_indices = @transform_2, window_bounds = array<i64: 16, 128>}, {pipeline_mode = #tpu.pipeline_mode<synchronous>, transform_indices = @transform_3, window_bounds = array<i64: 16, 128>}, {pipeline_mode = #tpu.pipeline_mode<synchronous>, transform_indices = @transform_4, window_bounds = array<i64: 128, 128>}, {pipeline_mode = #tpu.pipeline_mode<synchronous>, transform_indices = @transform_5, window_bounds = array<i64: 8, 36>}, {pipeline_mode = #tpu.pipeline_mode<synchronous>, transform_indices = @transform_6, window_bounds = array<i64: 8, 1>}, {transform_indices = @transform_7, window_bounds = array<i64: 8, 128>}]} {
    %c0 = arith.constant 0 : index
    %c0_0 = arith.constant 0 : index
    %0 = vector.load %arg1[%c0, %c0_0] : memref<2x128xi32, #tpu.memory_space<vmem>>, vector<1x128xi32>
    %c1 = arith.constant 1 : index
    %c0_1 = arith.constant 0 : index
    %1 = vector.load %arg1[%c1, %c0_1] : memref<2x128xi32, #tpu.memory_space<vmem>>, vector<1x128xi32>
    %c0_2 = arith.constant 0 : index
    %c0_3 = arith.constant 0 : index
    %2 = vector.load %arg2[%c0_2, %c0_3] : memref<16x128xf32, #tpu.memory_space<vmem>>, vector<16x128xf32>
    %c0_4 = arith.constant 0 : index
    %c0_5 = arith.constant 0 : index
    %3 = vector.load %arg3[%c0_4, %c0_5] : memref<16x128xf32, #tpu.memory_space<vmem>>, vector<16x128xf32>
    %c0_6 = arith.constant 0 : index
    %c0_7 = arith.constant 0 : index
    %4 = vector.load %arg4[%c0_6, %c0_7] : memref<16x128xf32, #tpu.memory_space<vmem>>, vector<16x128xf32>
    %c0_8 = arith.constant 0 : index
    %c0_9 = arith.constant 0 : index
    %5 = vector.load %arg5[%c0_8, %c0_9] : memref<128x128xf32, #tpu.memory_space<vmem>>, vector<128x128xf32>
    %cst = arith.constant dense<0.000000e+00> : vector<16x128xf32>
    %6 = tpu.matmul %2, %5, %cst {dimension_numbers = #tpu.dot_dimension_numbers<[1], [0], [0], [1], [0, 0, 1, 1], [], []>} : vector<16x128xf32>, vector<128x128xf32>, vector<16x128xf32> -> vector<16x128xf32>
    %cst_10 = arith.constant dense<0.000000e+00> : vector<128xf32>
    %7 = vector.multi_reduction <add>, %6, %cst_10 [0] : vector<16x128xf32> to vector<128xf32>
    %8 = vector.shape_cast %7 : vector<128xf32> to vector<1x128xf32>
    %9 = vector.broadcast %8 : vector<1x128xf32> to vector<16x128xf32>
    %10 = arith.subf %2, %9 : vector<16x128xf32>
    %11 = arith.mulf %10, %10 : vector<16x128xf32>
    %cst_11 = arith.constant dense<0.000000e+00> : vector<16x128xf32>
    %12 = tpu.matmul %11, %5, %cst_11 {dimension_numbers = #tpu.dot_dimension_numbers<[1], [0], [0], [1], [0, 0, 1, 1], [], []>} : vector<16x128xf32>, vector<128x128xf32>, vector<16x128xf32> -> vector<16x128xf32>
    %cst_12 = arith.constant dense<0.000000e+00> : vector<128xf32>
    %13 = vector.multi_reduction <add>, %12, %cst_12 [0] : vector<16x128xf32> to vector<128xf32>
    %14 = vector.shape_cast %13 : vector<128xf32> to vector<1x128xf32>
    %cst_13 = arith.constant 9.99999974E-6 : f32
    %15 = vector.broadcast %cst_13 : f32 to vector<1x128xf32>
    %16 = arith.addf %14, %15 : vector<1x128xf32>
    %17 = math.rsqrt %16 : vector<1x128xf32>
    %18 = vector.broadcast %17 : vector<1x128xf32> to vector<16x128xf32>
    %19 = arith.mulf %10, %18 : vector<16x128xf32>
    %20 = arith.mulf %19, %3 : vector<16x128xf32>
    %21 = arith.addf %20, %4 : vector<16x128xf32>
    %cst_14 = arith.constant 0.000000e+00 : f32
    %22 = vector.broadcast %cst_14 : f32 to vector<16x128xf32>
    %23 = arith.maximumf %21, %22 : vector<16x128xf32>
    %24 = vector.extract_strided_slice %23 {offsets = [0, 0], sizes = [4, 128], strides = [1, 1]} : vector<16x128xf32> to vector<4x128xf32>
    %25 = vector.extract_strided_slice %23 {offsets = [4, 0], sizes = [4, 128], strides = [1, 1]} : vector<16x128xf32> to vector<4x128xf32>
    %26 = vector.extract_strided_slice %23 {offsets = [8, 0], sizes = [4, 128], strides = [1, 1]} : vector<16x128xf32> to vector<4x128xf32>
    %27 = vector.extract_strided_slice %23 {offsets = [12, 0], sizes = [4, 128], strides = [1, 1]} : vector<16x128xf32> to vector<4x128xf32>
    %c0_i32 = arith.constant 0 : i32
    %28 = vector.broadcast %c0_i32 : i32 to vector<1x128xi32>
    %29 = arith.cmpi eq, %0, %28 : vector<1x128xi32>
    %c0_i32_15 = arith.constant 0 : i32
    %30 = vector.broadcast %c0_i32_15 : i32 to vector<1x128xi32>
    %31 = arith.cmpi eq, %1, %30 : vector<1x128xi32>
    %c7_i32 = arith.constant 7 : i32
    %32 = vector.broadcast %c7_i32 : i32 to vector<1x128xi32>
    %33 = arith.cmpi eq, %0, %32 : vector<1x128xi32>
    %c7_i32_16 = arith.constant 7 : i32
    %34 = vector.broadcast %c7_i32_16 : i32 to vector<1x128xi32>
    %35 = arith.cmpi eq, %1, %34 : vector<1x128xi32>
    %36 = arith.maximumf %24, %25 : vector<4x128xf32>
    %37 = arith.maximumf %26, %27 : vector<4x128xf32>
    %38 = arith.maximumf %36, %37 : vector<4x128xf32>
    %39 = arith.maximumf %25, %27 : vector<4x128xf32>
    %cst_17 = arith.constant -1.000000e+30 : f32
    %40 = vector.broadcast %cst_17 : f32 to vector<4x1xf32>
    %41 = vector.extract_strided_slice %39 {offsets = [0, 0], sizes = [4, 127], strides = [1, 1]} : vector<4x128xf32> to vector<4x127xf32>
    %42 = tpu.concatenate %40, %41 in 1 : vector<4x1xf32>, vector<4x127xf32> -> vector<4x128xf32>
    %cst_18 = arith.constant -1.000000e+30 : f32
    %43 = vector.shape_cast %31 : vector<1x128xi1> to vector<1x128xi1>
    %44 = vector.broadcast %43 : vector<1x128xi1> to vector<4x128xi1>
    %45 = vector.broadcast %cst_18 : f32 to vector<4x128xf32>
    %46 = arith.select %44, %45, %42 : vector<4x128xi1>, vector<4x128xf32>
    %47 = arith.maximumf %26, %27 : vector<4x128xf32>
    %cst_19 = arith.constant -1.000000e+30 : f32
    %48 = vector.broadcast %cst_19 : f32 to vector<4x8xf32>
    %49 = vector.extract_strided_slice %47 {offsets = [0, 0], sizes = [4, 120], strides = [1, 1]} : vector<4x128xf32> to vector<4x120xf32>
    %50 = tpu.concatenate %48, %49 in 1 : vector<4x8xf32>, vector<4x120xf32> -> vector<4x128xf32>
    %cst_20 = arith.constant -1.000000e+30 : f32
    %51 = vector.shape_cast %29 : vector<1x128xi1> to vector<1x128xi1>
    %52 = vector.broadcast %51 : vector<1x128xi1> to vector<4x128xi1>
    %53 = vector.broadcast %cst_20 : f32 to vector<4x128xf32>
    %54 = arith.select %52, %53, %50 : vector<4x128xi1>, vector<4x128xf32>
    %55 = arith.ori %29, %31 : vector<1x128xi1>
    %cst_21 = arith.constant -1.000000e+30 : f32
    %56 = vector.broadcast %cst_21 : f32 to vector<4x9xf32>
    %57 = vector.extract_strided_slice %27 {offsets = [0, 0], sizes = [4, 119], strides = [1, 1]} : vector<4x128xf32> to vector<4x119xf32>
    %58 = tpu.concatenate %56, %57 in 1 : vector<4x9xf32>, vector<4x119xf32> -> vector<4x128xf32>
    %cst_22 = arith.constant -1.000000e+30 : f32
    %59 = vector.shape_cast %55 : vector<1x128xi1> to vector<1x128xi1>
    %60 = vector.broadcast %59 : vector<1x128xi1> to vector<4x128xi1>
    %61 = vector.broadcast %cst_22 : f32 to vector<4x128xf32>
    %62 = arith.select %60, %61, %58 : vector<4x128xi1>, vector<4x128xf32>
    %63 = arith.maximumf %38, %46 : vector<4x128xf32>
    %64 = arith.maximumf %54, %62 : vector<4x128xf32>
    %65 = arith.maximumf %63, %64 : vector<4x128xf32>
    %cst_23 = arith.constant 0.000000e+00 : f32
    %66 = vector.broadcast %cst_23 : f32 to vector<4x9xf32>
    %67 = vector.extract_strided_slice %65 {offsets = [0, 0], sizes = [4, 119], strides = [1, 1]} : vector<4x128xf32> to vector<4x119xf32>
    %68 = tpu.concatenate %66, %67 in 1 : vector<4x9xf32>, vector<4x119xf32> -> vector<4x128xf32>
    %cst_24 = arith.constant 0.000000e+00 : f32
    %69 = vector.shape_cast %29 : vector<1x128xi1> to vector<1x128xi1>
    %70 = vector.broadcast %69 : vector<1x128xi1> to vector<4x128xi1>
    %71 = vector.broadcast %cst_24 : f32 to vector<4x128xf32>
    %72 = arith.select %70, %71, %68 : vector<4x128xi1>, vector<4x128xf32>
    %cst_25 = arith.constant 0.000000e+00 : f32
    %73 = vector.shape_cast %31 : vector<1x128xi1> to vector<1x128xi1>
    %74 = vector.broadcast %73 : vector<1x128xi1> to vector<4x128xi1>
    %75 = vector.broadcast %cst_25 : f32 to vector<4x128xf32>
    %76 = arith.select %74, %75, %72 : vector<4x128xi1>, vector<4x128xf32>
    %cst_26 = arith.constant 0.000000e+00 : f32
    %77 = vector.broadcast %cst_26 : f32 to vector<4x8xf32>
    %78 = vector.extract_strided_slice %65 {offsets = [0, 0], sizes = [4, 120], strides = [1, 1]} : vector<4x128xf32> to vector<4x120xf32>
    %79 = tpu.concatenate %77, %78 in 1 : vector<4x8xf32>, vector<4x120xf32> -> vector<4x128xf32>
    %cst_27 = arith.constant 0.000000e+00 : f32
    %80 = vector.shape_cast %29 : vector<1x128xi1> to vector<1x128xi1>
    %81 = vector.broadcast %80 : vector<1x128xi1> to vector<4x128xi1>
    %82 = vector.broadcast %cst_27 : f32 to vector<4x128xf32>
    %83 = arith.select %81, %82, %79 : vector<4x128xi1>, vector<4x128xf32>
    %cst_28 = arith.constant 0.000000e+00 : f32
    %84 = vector.broadcast %cst_28 : f32 to vector<4x7xf32>
    %85 = vector.extract_strided_slice %65 {offsets = [0, 0], sizes = [4, 121], strides = [1, 1]} : vector<4x128xf32> to vector<4x121xf32>
    %86 = tpu.concatenate %84, %85 in 1 : vector<4x7xf32>, vector<4x121xf32> -> vector<4x128xf32>
    %cst_29 = arith.constant 0.000000e+00 : f32
    %87 = vector.shape_cast %29 : vector<1x128xi1> to vector<1x128xi1>
    %88 = vector.broadcast %87 : vector<1x128xi1> to vector<4x128xi1>
    %89 = vector.broadcast %cst_29 : f32 to vector<4x128xf32>
    %90 = arith.select %88, %89, %86 : vector<4x128xi1>, vector<4x128xf32>
    %cst_30 = arith.constant 0.000000e+00 : f32
    %91 = vector.shape_cast %35 : vector<1x128xi1> to vector<1x128xi1>
    %92 = vector.broadcast %91 : vector<1x128xi1> to vector<4x128xi1>
    %93 = vector.broadcast %cst_30 : f32 to vector<4x128xf32>
    %94 = arith.select %92, %93, %90 : vector<4x128xi1>, vector<4x128xf32>
    %cst_31 = arith.constant 0.000000e+00 : f32
    %95 = vector.broadcast %cst_31 : f32 to vector<4x1xf32>
    %96 = vector.extract_strided_slice %65 {offsets = [0, 0], sizes = [4, 127], strides = [1, 1]} : vector<4x128xf32> to vector<4x127xf32>
    %97 = tpu.concatenate %95, %96 in 1 : vector<4x1xf32>, vector<4x127xf32> -> vector<4x128xf32>
    %cst_32 = arith.constant 0.000000e+00 : f32
    %98 = vector.shape_cast %31 : vector<1x128xi1> to vector<1x128xi1>
    %99 = vector.broadcast %98 : vector<1x128xi1> to vector<4x128xi1>
    %100 = vector.broadcast %cst_32 : f32 to vector<4x128xf32>
    %101 = arith.select %99, %100, %97 : vector<4x128xi1>, vector<4x128xf32>
    %cst_33 = arith.constant 0.000000e+00 : f32
    %102 = vector.broadcast %cst_33 : f32 to vector<4x1xf32>
    %103 = vector.extract_strided_slice %65 {offsets = [0, 1], sizes = [4, 127], strides = [1, 1]} : vector<4x128xf32> to vector<4x127xf32>
    %104 = tpu.concatenate %103, %102 in 1 : vector<4x127xf32>, vector<4x1xf32> -> vector<4x128xf32>
    %cst_34 = arith.constant 0.000000e+00 : f32
    %105 = vector.shape_cast %35 : vector<1x128xi1> to vector<1x128xi1>
    %106 = vector.broadcast %105 : vector<1x128xi1> to vector<4x128xi1>
    %107 = vector.broadcast %cst_34 : f32 to vector<4x128xf32>
    %108 = arith.select %106, %107, %104 : vector<4x128xi1>, vector<4x128xf32>
    %cst_35 = arith.constant 0.000000e+00 : f32
    %109 = vector.broadcast %cst_35 : f32 to vector<4x7xf32>
    %110 = vector.extract_strided_slice %65 {offsets = [0, 7], sizes = [4, 121], strides = [1, 1]} : vector<4x128xf32> to vector<4x121xf32>
    %111 = tpu.concatenate %110, %109 in 1 : vector<4x121xf32>, vector<4x7xf32> -> vector<4x128xf32>
    %cst_36 = arith.constant 0.000000e+00 : f32
    %112 = vector.shape_cast %33 : vector<1x128xi1> to vector<1x128xi1>
    %113 = vector.broadcast %112 : vector<1x128xi1> to vector<4x128xi1>
    %114 = vector.broadcast %cst_36 : f32 to vector<4x128xf32>
    %115 = arith.select %113, %114, %111 : vector<4x128xi1>, vector<4x128xf32>
    %cst_37 = arith.constant 0.000000e+00 : f32
    %116 = vector.shape_cast %31 : vector<1x128xi1> to vector<1x128xi1>
    %117 = vector.broadcast %116 : vector<1x128xi1> to vector<4x128xi1>
    %118 = vector.broadcast %cst_37 : f32 to vector<4x128xf32>
    %119 = arith.select %117, %118, %115 : vector<4x128xi1>, vector<4x128xf32>
    %cst_38 = arith.constant 0.000000e+00 : f32
    %120 = vector.broadcast %cst_38 : f32 to vector<4x8xf32>
    %121 = vector.extract_strided_slice %65 {offsets = [0, 8], sizes = [4, 120], strides = [1, 1]} : vector<4x128xf32> to vector<4x120xf32>
    %122 = tpu.concatenate %121, %120 in 1 : vector<4x120xf32>, vector<4x8xf32> -> vector<4x128xf32>
    %cst_39 = arith.constant 0.000000e+00 : f32
    %123 = vector.shape_cast %33 : vector<1x128xi1> to vector<1x128xi1>
    %124 = vector.broadcast %123 : vector<1x128xi1> to vector<4x128xi1>
    %125 = vector.broadcast %cst_39 : f32 to vector<4x128xf32>
    %126 = arith.select %124, %125, %122 : vector<4x128xi1>, vector<4x128xf32>
    %cst_40 = arith.constant 0.000000e+00 : f32
    %127 = vector.broadcast %cst_40 : f32 to vector<4x9xf32>
    %128 = vector.extract_strided_slice %65 {offsets = [0, 9], sizes = [4, 119], strides = [1, 1]} : vector<4x128xf32> to vector<4x119xf32>
    %129 = tpu.concatenate %128, %127 in 1 : vector<4x119xf32>, vector<4x9xf32> -> vector<4x128xf32>
    %cst_41 = arith.constant 0.000000e+00 : f32
    %130 = vector.shape_cast %33 : vector<1x128xi1> to vector<1x128xi1>
    %131 = vector.broadcast %130 : vector<1x128xi1> to vector<4x128xi1>
    %132 = vector.broadcast %cst_41 : f32 to vector<4x128xf32>
    %133 = arith.select %131, %132, %129 : vector<4x128xi1>, vector<4x128xf32>
    %cst_42 = arith.constant 0.000000e+00 : f32
    %134 = vector.shape_cast %35 : vector<1x128xi1> to vector<1x128xi1>
    %135 = vector.broadcast %134 : vector<1x128xi1> to vector<4x128xi1>
    %136 = vector.broadcast %cst_42 : f32 to vector<4x128xf32>
    %137 = arith.select %135, %136, %133 : vector<4x128xi1>, vector<4x128xf32>
    %138 = tpu.concatenate %76, %83, %94, %101, %65, %108, %119, %126, %137 in 0 : vector<4x128xf32>, vector<4x128xf32>, vector<4x128xf32>, vector<4x128xf32>, vector<4x128xf32>, vector<4x128xf32>, vector<4x128xf32>, vector<4x128xf32>, vector<4x128xf32> -> vector<36x128xf32>
    %c0_43 = arith.constant 0 : index
    %c0_44 = arith.constant 0 : index
    %139 = vector.load %arg6[%c0_43, %c0_44] : memref<8x36xf32, #tpu.memory_space<vmem>>, vector<8x36xf32>
    %cst_45 = arith.constant dense<0.000000e+00> : vector<8x128xf32>
    %140 = tpu.matmul %139, %138, %cst_45 {dimension_numbers = #tpu.dot_dimension_numbers<[1], [0], [0], [1], [0, 0, 1, 1], [], []>} : vector<8x36xf32>, vector<36x128xf32>, vector<8x128xf32> -> vector<8x128xf32>
    %c0_46 = arith.constant 0 : index
    %c0_47 = arith.constant 0 : index
    %141 = vector.load %arg7[%c0_46, %c0_47] : memref<8x1xf32, #tpu.memory_space<vmem>>, vector<8x1xf32>
    %142 = vector.broadcast %141 : vector<8x1xf32> to vector<8x128xf32>
    %143 = arith.addf %140, %142 : vector<8x128xf32>
    %c0_48 = arith.constant 0 : index
    %c0_49 = arith.constant 0 : index
    %144 = vector.load %arg8[%c0_48, %c0_49] : memref<8x128xf32, #tpu.memory_space<vmem>>, vector<8x128xf32>
    tpu.vector_store %arg8[%c0_48, %c0_49], %143 {strides = array<i32>} : memref<8x128xf32, #tpu.memory_space<vmem>>, vector<8x128xf32>,
    return
  }
  func.func @transform_0(%arg0: i32) -> (i32, i32) {
    %c0_i32 = arith.constant 0 : i32
    %c0_i32_0 = arith.constant 0 : i32
    %c0_i32_1 = arith.constant 0 : i32
    return %c0_i32, %c0_i32_0 : i32, i32
  }
  func.func @transform_1(%arg0: i32) -> (i32, i32) {
    %c0_i32 = arith.constant 0 : i32
    %c0_i32_0 = arith.constant 0 : i32
    return %c0_i32, %arg0 : i32, i32
  }
  func.func @transform_2(%arg0: i32) -> (i32, i32) {
    %c0_i32 = arith.constant 0 : i32
    %c0_i32_0 = arith.constant 0 : i32
    %c0_i32_1 = arith.constant 0 : i32
    return %c0_i32, %c0_i32_0 : i32, i32
  }
  func.func @transform_3(%arg0: i32) -> (i32, i32) {
    %c0_i32 = arith.constant 0 : i32
    %c0_i32_0 = arith.constant 0 : i32
    %c0_i32_1 = arith.constant 0 : i32
    return %c0_i32, %c0_i32_0 : i32, i32
  }
  func.func @transform_4(%arg0: i32) -> (i32, i32) {
    %c0_i32 = arith.constant 0 : i32
    %c0_i32_0 = arith.constant 0 : i32
    %c0_i32_1 = arith.constant 0 : i32
    return %c0_i32, %c0_i32_0 : i32, i32
  }
  func.func @transform_5(%arg0: i32) -> (i32, i32) {
    %c0_i32 = arith.constant 0 : i32
    %c0_i32_0 = arith.constant 0 : i32
    %c0_i32_1 = arith.constant 0 : i32
    return %c0_i32, %c0_i32_0 : i32, i32
  }
  func.func @transform_6(%arg0: i32) -> (i32, i32) {
    %c0_i32 = arith.constant 0 : i32
    %c0_i32_0 = arith.constant 0 : i32
    %c0_i32_1 = arith.constant 0 : i32
    return %c0_i32, %c0_i32_0 : i32, i32
  }
  func.func @transform_7(%arg0: i32) -> (i32, i32) {
    %c0_i32 = arith.constant 0 : i32
    %c0_i32_0 = arith.constant 0 : i32
    return %c0_i32, %arg0 : i32, i32
  }
}

</mosaic_0001>

<llo_original>
// kernel: tpu_custom_call.1
$region0: #{tpu_custom_call.1}
  #allocation0 [shape = 'u32[]', space=smem, size = 0x4, offset = 0x4, fixed_abs, tag = 'smem constant byte address 0x4 - core index']
  #allocation1 [shape = 'u32[144,128]{1,0:T(1,128)}', space=vmem, size = 0x12000, scoped, tag = 'internal scratch']
  %s0 = inlined_call_operand.hbm [shape: s32[2,128], index: 0, kind: input, shape index: {}]
  %s1 = inlined_call_operand.hbm [shape: f32[16,128], index: 1, kind: input, shape index: {}]
  %s2 = inlined_call_operand.vmem [shape: f32[16,128], index: 2, kind: input, shape index: {}]
  %s3 = inlined_call_operand.hbm [shape: f32[16,128], index: 3, kind: input, shape index: {}]
  %s4 = inlined_call_operand.hbm [shape: f32[128,128], index: 4, kind: input, shape index: {}]
  %s5 = inlined_call_operand.vmem [shape: f32[8,36], index: 5, kind: input, shape index: {}]
  %s6 = inlined_call_operand.vmem [shape: f32[8,1], index: 6, kind: input, shape index: {}]
  %s7 = inlined_call_operand.hbm [shape: f32[8,128], index: 7, kind: output, shape index: {}]
  %s8 = sld [smem:[#allocation0]]
  $region54: #{tpu_custom_call.1} parent=0
    _
  %s10 = ssub.s32 1, %s8
  %s11 = scalar_select 0, %s10, %s8
  $region1: #{tpu_custom_call.1} parent=0
    #allocation2 [shape = 'u8[1024]{0}', space=vmem, size = 0x400, scoped, tag = 'input window, operand 0, single buffered']
    #allocation3 [shape = 's32[1]{0}', space=sflag, size = 0x4, scoped, tag = 'scoped memory for tpu_custom_call.1']
    #allocation4 [shape = 's32[1]{0}', space=sflag, size = 0x4, scoped, tag = 'scoped memory for tpu_custom_call.1']
    #allocation5 [shape = 'u8[8192]{0}', space=vmem, size = 0x2000, scoped, tag = 'input window, operand 1, single buffered']
    #allocation6 [shape = 's32[1]{0}', space=sflag, size = 0x4, scoped, tag = 'scoped memory for tpu_custom_call.1']
    #allocation7 [shape = 'u8[8192]{0}', space=vmem, size = 0x2000, scoped, tag = 'input window, operand 3, single buffered']
    #allocation8 [shape = 'u8[65536]{0}', space=vmem, size = 0x10000, scoped, tag = 'input window, operand 4, single buffered']
    #allocation9 [shape = 's32[1]{0}', space=sflag, size = 0x4, scoped, tag = 'scoped memory for tpu_custom_call.1']
    #allocation10 [shape = 'u8[4096]{0}', space=vmem, size = 0x1000, scoped, tag = 'output window, operand 0, single buffered']
    %12 = vsyncpa [#allocation3], 0
    %13 = vsyncpa [#allocation6], 0
    %14 = vsyncpa [#allocation9], 0
    %15 = vsyncpa [#allocation4], 0
    // Predicated region
    $region2: #{tpu_custom_call.1} parent=1 // pred_check
      _
    $region3: #{tpu_custom_call.1} parent=1 // pred_check_branch
      %17 = sbr.rel (0) target = $region5
    $region4: #{tpu_custom_call.1} parent=1 // pred_region
      %s19 = ssub.s32 32, 32
      %20 = vsyncadd [#allocation3], %s19
      %s22 = sshll.u32 [#allocation2], 4
      %s23 = int_to_ptr.vmem [resolvable:$true] %s22
      %25 = dma.hbm_to_vmem [thread:$0]  %s0, 32, %s23, [#allocation3]
    $region5: #{tpu_custom_call.1} parent=1 // pred_fallthru
      _
    // Predicated region
    $region6: #{tpu_custom_call.1} parent=1 // pred_check
      _
    $region7: #{tpu_custom_call.1} parent=1 // pred_check_branch
      %27 = sbr.rel (0) target = $region9
    $region8: #{tpu_custom_call.1} parent=1 // pred_region
      %s29 = ssub.s32 256, 256
      %30 = vsyncadd [#allocation6], %s29
      %s31 = sshll.u32 [#allocation5], 4
      %s32 = int_to_ptr.vmem [resolvable:$true] %s31
      %37 = dma.hbm_to_vmem [thread:$0]  %s1, 256, %s32, [#allocation6], 128, 128, 8
    $region9: #{tpu_custom_call.1} parent=1 // pred_fallthru
      _
    // Predicated region
    $region10: #{tpu_custom_call.1} parent=1 // pred_check
      _
    $region11: #{tpu_custom_call.1} parent=1 // pred_check_branch
      %39 = sbr.rel (0) target = $region13
    $region12: #{tpu_custom_call.1} parent=1 // pred_region
      _
    $region13: #{tpu_custom_call.1} parent=1 // pred_fallthru
      _
    // Predicated region
    $region14: #{tpu_custom_call.1} parent=1 // pred_check
      _
    $region15: #{tpu_custom_call.1} parent=1 // pred_check_branch
      %41 = sbr.rel (0) target = $region17
    $region16: #{tpu_custom_call.1} parent=1 // pred_region
      %s43 = ssub.s32 256, 256
      %44 = vsyncadd [#allocation6], %s43
      %s45 = sshll.u32 [#allocation7], 4
      %s46 = int_to_ptr.vmem [resolvable:$true] %s45
      %51 = dma.hbm_to_vmem [thread:$0]  %s3, 256, %s46, [#allocation6], 128, 128, 8
    $region17: #{tpu_custom_call.1} parent=1 // pred_fallthru
      _
    // Predicated region
    $region18: #{tpu_custom_call.1} parent=1 // pred_check
      _
    $region19: #{tpu_custom_call.1} parent=1 // pred_check_branch
      %53 = sbr.rel (0) target = $region21
    $region20: #{tpu_custom_call.1} parent=1 // pred_region
      %s55 = ssub.s32 2048, 2048
      %56 = vsyncadd [#allocation9], %s55
      %s57 = sshll.u32 [#allocation8], 4
      %s58 = int_to_ptr.vmem [resolvable:$true] %s57
      %63 = dma.hbm_to_vmem [thread:$0]  %s4, 2048, %s58, [#allocation9], 128, 128, 8
    $region21: #{tpu_custom_call.1} parent=1 // pred_fallthru
      _
    // Predicated region
    $region22: #{tpu_custom_call.1} parent=1 // pred_check
      _
    $region23: #{tpu_custom_call.1} parent=1 // pred_check_branch
      %65 = sbr.rel (0) target = $region25
    $region24: #{tpu_custom_call.1} parent=1 // pred_region
      _
    $region25: #{tpu_custom_call.1} parent=1 // pred_fallthru
      _
    // Predicated region
    $region26: #{tpu_custom_call.1} parent=1 // pred_check
      _
    $region27: #{tpu_custom_call.1} parent=1 // pred_check_branch
      %67 = sbr.rel (0) target = $region29
    $region28: #{tpu_custom_call.1} parent=1 // pred_region
      _
    $region29: #{tpu_custom_call.1} parent=1 // pred_fallthru
      _
    // Predicated region
    $region30: #{tpu_custom_call.1} parent=1 // pred_check
      _
    $region31: #{tpu_custom_call.1} parent=1 // pred_check_branch
      %69 = sbr.rel (0) target = $region33
    $region32: #{tpu_custom_call.1} parent=1 // pred_region
      %70 = dma.done [#allocation3], 32
    $region33: #{tpu_custom_call.1} parent=1 // pred_fallthru
      _
    // Predicated region
    $region34: #{tpu_custom_call.1} parent=1 // pred_check
      _
    $region35: #{tpu_custom_call.1} parent=1 // pred_check_branch
      %72 = sbr.rel (0) target = $region37
    $region36: #{tpu_custom_call.1} parent=1 // pred_region
      %73 = dma.done [#allocation6], 256
    $region37: #{tpu_custom_call.1} parent=1 // pred_fallthru
      _
    // Predicated region
    $region38: #{tpu_custom_call.1} parent=1 // pred_check
      _
    $region39: #{tpu_custom_call.1} parent=1 // pred_check_branch
      %75 = sbr.rel (0) target = $region41
    $region40: #{tpu_custom_call.1} parent=1 // pred_region
      %76 = dma.done [#allocation6], 256
    $region41: #{tpu_custom_call.1} parent=1 // pred_fallthru
      _
    // Predicated region
    $region42: #{tpu_custom_call.1} parent=1 // pred_check
      _
    $region43: #{tpu_custom_call.1} parent=1 // pred_check_branch
      %78 = sbr.rel (0) target = $region45
    $region44: #{tpu_custom_call.1} parent=1 // pred_region
      %79 = dma.done [#allocation9], 2048
    $region45: #{tpu_custom_call.1} parent=1 // pred_fallthru
      _
    %v80 = vld [vmem:[#allocation2] sm:$0x1]
    %v81 = vld [vmem:[#allocation2 + $0x1] sm:$0x1]
    %v82 = vld [vmem:[#allocation5] sm:$0xff]
    %v83 = vld [vmem:[#allocation5 + $0x8] sm:$0xff]
    %v84 = vld [vmem:[%s2] sm:$0xff]
    %v85 = vld [vmem:[%s2 + $0x8] sm:$0xff]
    %v86 = vld [vmem:[#allocation7] sm:$0xff]
    %v87 = vld [vmem:[#allocation7 + $0x8] sm:$0xff]
    %v88 = vld [vmem:[#allocation8] sm:$0xff]
    %v89 = vld [vmem:[#allocation8 + $0x8] sm:$0xff]
    %v90 = vld [vmem:[#allocation8 + $0x10] sm:$0xff]
    %v91 = vld [vmem:[#allocation8 + $0x18] sm:$0xff]
    %v92 = vld [vmem:[#allocation8 + $0x20] sm:$0xff]
    %v93 = vld [vmem:[#allocation8 + $0x28] sm:$0xff]
    %v94 = vld [vmem:[#allocation8 + $0x30] sm:$0xff]
    %v95 = vld [vmem:[#allocation8 + $0x38] sm:$0xff]
    %v96 = vld [vmem:[#allocation8 + $0x40] sm:$0xff]
    %v97 = vld [vmem:[#allocation8 + $0x48] sm:$0xff]
    %v98 = vld [vmem:[#allocation8 + $0x50] sm:$0xff]
    %v99 = vld [vmem:[#allocation8 + $0x58] sm:$0xff]
    %v100 = vld [vmem:[#allocation8 + $0x60] sm:$0xff]
    %v101 = vld [vmem:[#allocation8 + $0x68] sm:$0xff]
    %v102 = vld [vmem:[#allocation8 + $0x70] sm:$0xff]
    %v103 = vld [vmem:[#allocation8 + $0x78] sm:$0xff]
    %104 = vmatprep.subr.mxu0 0.0
    %105 = vmatpush1.msra.mxu0 %v88
    %106 = vmatprep.subr.mxu0 0.0
    %107 = vmatpush1.msra.mxu0 %v89
    %108 = vmatprep.subr.mxu0 0.0
    %109 = vmatpush1.msra.mxu0 %v90
    %110 = vmatprep.subr.mxu0 0.0
    %111 = vmatpush1.msra.mxu0 %v91
    %112 = vmatprep.subr.mxu0 0.0
    %113 = vmatpush1.msra.mxu0 %v92
    %114 = vmatprep.subr.mxu0 0.0
    %115 = vmatpush1.msra.mxu0 %v93
    %116 = vmatprep.subr.mxu0 0.0
    %117 = vmatpush1.msra.mxu0 %v94
    %118 = vmatprep.subr.mxu0 0.0
    %119 = vmatpush1.msra.mxu0 %v95
    %120 = vmatprep.subr.mxu0 0.0
    %121 = vmatpush1.msra.mxu0 %v96
    %122 = vmatprep.subr.mxu0 0.0
    %123 = vmatpush1.msra.mxu0 %v97
    %124 = vmatprep.subr.mxu0 0.0
    %125 = vmatpush1.msra.mxu0 %v98
    %126 = vmatprep.subr.mxu0 0.0
    %127 = vmatpush1.msra.mxu0 %v99
    %128 = vmatprep.subr.mxu0 0.0
    %129 = vmatpush1.msra.mxu0 %v100
    %130 = vmatprep.subr.mxu0 0.0
    %131 = vmatpush1.msra.mxu0 %v101
    %132 = vmatprep.subr.mxu0 0.0
    %133 = vmatpush1.msra.mxu0 %v102
    %134 = vmatprep.subr.mxu0 0.0
    %135 = vmatpush1.msra.mxu0 %v103
    %136 = vmatprep.subr.mxu0 0.0
    %137 = vmatpush1.msra.mxu0 0.0
    %138 = vmatprep.subr.mxu0 0.0
    %139 = vmatpush1.msra.mxu0 0.0
    %140 = vmatprep.subr.mxu0 0.0
    %141 = vmatpush1.msra.mxu0 0.0
    %142 = vmatprep.subr.mxu0 0.0
    %143 = vmatpush1.msra.mxu0 0.0
    %144 = vmatprep.subr.mxu0 0.0
    %145 = vmatpush1.msra.mxu0 0.0
    %146 = vmatprep.subr.mxu0 0.0
    %147 = vmatpush1.msra.mxu0 0.0
    %148 = vmatprep.subr.mxu0 0.0
    %149 = vmatpush1.msra.mxu0 0.0
    %150 = vmatprep.subr.mxu0 0.0
    %151 = vmatpush1.msra.mxu0 0.0
    %152 = vmatprep.subr.mxu0 0.0
    %153 = vmatpush1.msra.mxu0 0.0
    %154 = vmatprep.subr.mxu0 0.0
    %155 = vmatpush1.msra.mxu0 0.0
    %156 = vmatprep.subr.mxu0 0.0
    %157 = vmatpush1.msra.mxu0 0.0
    %158 = vmatprep.subr.mxu0 0.0
    %159 = vmatpush1.msra.mxu0 0.0
    %160 = vmatprep.subr.mxu0 0.0
    %161 = vmatpush1.msra.mxu0 0.0
    %162 = vmatprep.subr.mxu0 0.0
    %163 = vmatpush1.msra.mxu0 0.0
    %164 = vmatprep.subr.mxu0 0.0
    %165 = vmatpush1.msra.mxu0 0.0
    %166 = vmatprep.subr.mxu0 0.0
    %167 = vmatpush1.msra.mxu0 0.0
    %168 = vmatprep.mubr.f32.mxu0 0.0
    %169 = vmatmul.mubr.f32.gmra.mrb[0].mxu0 %v82
    %v170 = vpop.f32.mrb[0].mxu0
    %v171 = vadd.f32 0.0, %v170
    %v172 = vpop.f32.mrb[0].mxu0
    %173 = vmatprep.mubr.f32.mxu0 0.0
    %174 = vmatmul.mubr.f32.gmra.mrb[0].mxu0 %v83
    %v175 = vpop.f32.mrb[0].mxu0
    %v176 = vadd.f32 0.0, %v175
    %v177 = vpop.f32.mrb[0].mxu0
    %178 = vdwg.mxu0
    %v179 = vadd.f32 %v171, %v176
    %v180 = vrot.slane %v179, 4
    %v181 = vadd.f32 %v179, %v180
    %v182 = vrot.slane %v181, 2
    %v183 = vadd.f32 %v181, %v182
    %v184 = vrot.slane %v183, 1
    %v185 = vadd.f32 %v183, %v184
    %v186 = vsub.f32 %v82, %v185
    %v187 = vsub.f32 %v83, %v185
    %v188 = vmul.f32 %v186, %v186
    %v189 = vmul.f32 %v187, %v187
    %190 = vmatprep.subr.mxu0 0.0
    %191 = vmatpush1.msra.mxu0 %v88
    %192 = vmatprep.subr.mxu0 0.0
    %193 = vmatpush1.msra.mxu0 %v89
    %194 = vmatprep.subr.mxu0 0.0
    %195 = vmatpush1.msra.mxu0 %v90
    %196 = vmatprep.subr.mxu0 0.0
    %197 = vmatpush1.msra.mxu0 %v91
    %198 = vmatprep.subr.mxu0 0.0
    %199 = vmatpush1.msra.mxu0 %v92
    %200 = vmatprep.subr.mxu0 0.0
    %201 = vmatpush1.msra.mxu0 %v93
    %202 = vmatprep.subr.mxu0 0.0
    %203 = vmatpush1.msra.mxu0 %v94
    %204 = vmatprep.subr.mxu0 0.0
    %205 = vmatpush1.msra.mxu0 %v95
    %206 = vmatprep.subr.mxu0 0.0
    %207 = vmatpush1.msra.mxu0 %v96
    %208 = vmatprep.subr.mxu0 0.0
    %209 = vmatpush1.msra.mxu0 %v97
    %210 = vmatprep.subr.mxu0 0.0
    %211 = vmatpush1.msra.mxu0 %v98
    %212 = vmatprep.subr.mxu0 0.0
    %213 = vmatpush1.msra.mxu0 %v99
    %214 = vmatprep.subr.mxu0 0.0
    %215 = vmatpush1.msra.mxu0 %v100
    %216 = vmatprep.subr.mxu0 0.0
    %217 = vmatpush1.msra.mxu0 %v101
    %218 = vmatprep.subr.mxu0 0.0
    %219 = vmatpush1.msra.mxu0 %v102
    %220 = vmatprep.subr.mxu0 0.0
    %221 = vmatpush1.msra.mxu0 %v103
    %222 = vmatprep.subr.mxu0 0.0
    %223 = vmatpush1.msra.mxu0 0.0
    %224 = vmatprep.subr.mxu0 0.0
    %225 = vmatpush1.msra.mxu0 0.0
    %226 = vmatprep.subr.mxu0 0.0
    %227 = vmatpush1.msra.mxu0 0.0
    %228 = vmatprep.subr.mxu0 0.0
    %229 = vmatpush1.msra.mxu0 0.0
    %230 = vmatprep.subr.mxu0 0.0
    %231 = vmatpush1.msra.mxu0 0.0
    %232 = vmatprep.subr.mxu0 0.0
    %233 = vmatpush1.msra.mxu0 0.0
    %234 = vmatprep.subr.mxu0 0.0
    %235 = vmatpush1.msra.mxu0 0.0
    %236 = vmatprep.subr.mxu0 0.0
    %237 = vmatpush1.msra.mxu0 0.0
    %238 = vmatprep.subr.mxu0 0.0
    %239 = vmatpush1.msra.mxu0 0.0
    %240 = vmatprep.subr.mxu0 0.0
    %241 = vmatpush1.msra.mxu0 0.0
    %242 = vmatprep.subr.mxu0 0.0
    %243 = vmatpush1.msra.mxu0 0.0
    %244 = vmatprep.subr.mxu0 0.0
    %245 = vmatpush1.msra.mxu0 0.0
    %246 = vmatprep.subr.mxu0 0.0
    %247 = vmatpush1.msra.mxu0 0.0
    %248 = vmatprep.subr.mxu0 0.0
    %249 = vmatpush1.msra.mxu0 0.0
    %250 = vmatprep.subr.mxu0 0.0
    %251 = vmatpush1.msra.mxu0 0.0
    %252 = vmatprep.subr.mxu0 0.0
    %253 = vmatpush1.msra.mxu0 0.0
    %254 = vmatprep.mubr.f32.mxu0 0.0
    %255 = vmatmul.mubr.f32.gmra.mrb[0].mxu0 %v188
    %v256 = vpop.f32.mrb[0].mxu0
    %v257 = vadd.f32 0.0, %v256
    %v258 = vpop.f32.mrb[0].mxu0
    %259 = vmatprep.mubr.f32.mxu0 0.0
    %260 = vmatmul.mubr.f32.gmra.mrb[0].mxu0 %v189
    %v261 = vpop.f32.mrb[0].mxu0
    %v262 = vadd.f32 0.0, %v261
    %v263 = vpop.f32.mrb[0].mxu0
    %264 = vdwg.mxu0
    %v265 = vadd.f32 %v257, %v262
    %v266 = vrot.slane %v265, 4
    %v267 = vadd.f32 %v265, %v266
    %v268 = vrot.slane %v267, 2
    %v269 = vadd.f32 %v267, %v268
    %v270 = vrot.slane %v269, 1
    %v271 = vadd.f32 %v269, %v270
    %v272 = vadd.f32 %v271, 1e-05
    %v273 = vrsqrt.pop %v272
    %v274 = vmul.f32 %v186, %v273
    %v275 = vmul.f32 %v187, %v273
    %v276 = vmul.f32 %v274, %v84
    %v277 = vmul.f32 %v275, %v85
    %v278 = vadd.f32 %v276, %v86
    %v279 = vadd.f32 %v277, %v87
    %v280 = vmax.f32 %v278, 0.0
    %v281 = vmax.f32 %v279, 0.0
    %vm282 = vcmp.eq.s32.totalorder %v80, 0
    %vm283 = vcmp.eq.s32.totalorder %v81, 0
    %vm284 = vcmp.eq.s32.totalorder %v80, 7
    %vm285 = vcmp.eq.s32.totalorder %v81, 7
    %v287 = vrot.slane %v280, 4
    %v289 = vmax.f32 %v280, %v287
    %v291 = vrot.slane %v281, 4
    %v293 = vmax.f32 %v281, %v291
    %v294 = vmax.f32 %v289, %v293
    %v295 = vmax.f32 %v280, %v281
    %v297 = vrot.slane %v295, 4
    %298 = vrot.lane.b32.xlu0 %v297, 1
    %v299 = vpop.permute.xlu0 %298
    %vm301 = vcmask 7168
    %v302 = vsel %vm301, -1e+30, %v299
    %v303 = vsel %vm283, 1, 0
    %v304 = vlaneseq
    %v305 = vshrl.u32 %v304, 7
    %v306 = vsub.s32 0, %v305
    %v307 = vrot.slane %v303, %v306
    %vm308 = vcmp.eq.s32.totalorder %v307, 1
    %v309 = vsel %vm308, -1e+30, %v302
    %311 = vrot.lane.b32.xlu0 %v293, 8
    %v312 = vpop.permute.xlu0 %311
    %vm314 = vcmask 64512
    %v315 = vsel %vm314, -1e+30, %v312
    %v316 = vsel %vm282, 1, 0
    %v317 = vlaneseq
    %v318 = vshrl.u32 %v317, 7
    %v319 = vsub.s32 0, %v318
    %v320 = vrot.slane %v316, %v319
    %vm321 = vcmp.eq.s32.totalorder %v320, 1
    %v322 = vsel %vm321, -1e+30, %v315
    %vm323 = vmor %vm282, %vm283
    %324 = vrot.lane.b32.xlu0 %v291, 9
    %v325 = vpop.permute.xlu0 %324
    %vm327 = vcmask 72704
    %v328 = vsel %vm327, -1e+30, %v325
    %v329 = vsel %vm323, 1, 0
    %v330 = vlaneseq
    %v331 = vshrl.u32 %v330, 7
    %v332 = vsub.s32 0, %v331
    %v333 = vrot.slane %v329, %v332
    %vm334 = vcmp.eq.s32.totalorder %v333, 1
    %v335 = vsel %vm334, -1e+30, %v328
    %v336 = vmax.f32 %v294, %v309
    %v337 = vmax.f32 %v322, %v335
    %v338 = vmax.f32 %v336, %v337
    %340 = vrot.lane.b32.xlu0 %v338, 9
    %v341 = vpop.permute.xlu0 %340
    %v343 = vsel %vm327, 0.0, %v341
    %v344 = vsel %vm321, 0.0, %v343
    %v345 = vsel %vm308, 0.0, %v344
    %346 = vrot.lane.b32.xlu0 %v338, 8
    %v347 = vpop.permute.xlu0 %346
    %v349 = vsel %vm314, 0.0, %v347
    %v350 = vsel %vm321, 0.0, %v349
    %351 = vrot.lane.b32.xlu0 %v338, 7
    %v352 = vpop.permute.xlu0 %351
    %vm354 = vcmask 56320
    %v355 = vsel %vm354, 0.0, %v352
    %v356 = vsel %vm321, 0.0, %v355
    %v357 = vsel %vm285, 1, 0
    %v358 = vlaneseq
    %v359 = vshrl.u32 %v358, 7
    %v360 = vsub.s32 0, %v359
    %v361 = vrot.slane %v357, %v360
    %vm362 = vcmp.eq.s32.totalorder %v361, 1
    %v363 = vsel %vm362, 0.0, %v356
    %364 = vrot.lane.b32.xlu0 %v338, 1
    %v365 = vpop.permute.xlu0 %364
    %v367 = vsel %vm301, 0.0, %v365
    %v368 = vsel %vm308, 0.0, %v367
    %369 = vrot.lane.b32.xlu0 %v338, 127
    %v370 = vpop.permute.xlu0 %369
    %vm372 = vcmask 1039360
    %v373 = vsel %vm372, %v370, 0.0
    %v374 = vsel %vm362, 0.0, %v373
    %375 = vrot.lane.b32.xlu0 %v338, 121
    %v376 = vpop.permute.xlu0 %375
    %vm378 = vcmask 990208
    %v379 = vsel %vm378, %v376, 0.0
    %v380 = vsel %vm284, 1, 0
    %v381 = vlaneseq
    %v382 = vshrl.u32 %v381, 7
    %v383 = vsub.s32 0, %v382
    %v384 = vrot.slane %v380, %v383
    %vm385 = vcmp.eq.s32.totalorder %v384, 1
    %v386 = vsel %vm385, 0.0, %v379
    %v387 = vsel %vm308, 0.0, %v386
    %388 = vrot.lane.b32.xlu0 %v338, 120
    %v389 = vpop.permute.xlu0 %388
    %vm391 = vcmask 982016
    %v392 = vsel %vm391, %v389, 0.0
    %v393 = vsel %vm385, 0.0, %v392
    %394 = vrot.lane.b32.xlu0 %v338, 119
    %v395 = vpop.permute.xlu0 %394
    %vm397 = vcmask 973824
    %v398 = vsel %vm397, %v395, 0.0
    %v399 = vsel %vm385, 0.0, %v398
    %v400 = vsel %vm362, 0.0, %v399
    %v402 = vrot.slane %v350, 4
    %v405 = vrot.slane %v368, 4
    %v408 = vrot.slane %v374, 4
    %v411 = vrot.slane %v393, 4
    %vm413 = vcmask 1043456
    %v414 = vsel %vm413, %v345, %v402
    %v415 = vsel %vm413, %v363, %v405
    %v416 = vsel %vm413, %v338, %v408
    %v417 = vsel %vm413, %v387, %v411
    %v418 = vld [vmem:[%s5] sm:$0xff]
    %v419 = vld [vmem:[%s6] sm:$0xff]
    %421 = vset.pattern.permute.xlu0 0
    %422 = vperm.xlu0 %421, %v419
    %v423 = vpop.permute.xlu0 %422
    %vm425 = vcmask 293888
    %v427 = vsel %vm425, %v418, 0
    %v430 = vsel %vm413, %v400, 0
    %432 = vmatprep.subr.mxu0 0.0
    %433 = vmatpush1.msra.mxu0 %v414
    %434 = vmatprep.subr.mxu0 0.0
    %435 = vmatpush1.msra.mxu0 %v415
    %436 = vmatprep.subr.mxu0 0.0
    %437 = vmatpush1.msra.mxu0 %v416
    %438 = vmatprep.subr.mxu0 0.0
    %439 = vmatpush1.msra.mxu0 %v417
    %440 = vmatprep.subr.mxu0 0.0
    %441 = vmatpush1.msra.mxu0 %v430
    %442 = vmatprep.subr.mxu0 0.0
    %443 = vmatpush1.msra.mxu0 0.0
    %444 = vmatprep.subr.mxu0 0.0
    %445 = vmatpush1.msra.mxu0 0.0
    %446 = vmatprep.subr.mxu0 0.0
    %447 = vmatpush1.msra.mxu0 0.0
    %448 = vmatprep.subr.mxu0 0.0
    %449 = vmatpush1.msra.mxu0 0.0
    %450 = vmatprep.subr.mxu0 0.0
    %451 = vmatpush1.msra.mxu0 0.0
    %452 = vmatprep.subr.mxu0 0.0
    %453 = vmatpush1.msra.mxu0 0.0
    %454 = vmatprep.subr.mxu0 0.0
    %455 = vmatpush1.msra.mxu0 0.0
    %456 = vmatprep.subr.mxu0 0.0
    %457 = vmatpush1.msra.mxu0 0.0
    %458 = vmatprep.subr.mxu0 0.0
    %459 = vmatpush1.msra.mxu0 0.0
    %460 = vmatprep.subr.mxu0 0.0
    %461 = vmatpush1.msra.mxu0 0.0
    %462 = vmatprep.subr.mxu0 0.0
    %463 = vmatpush1.msra.mxu0 0.0
    %464 = vmatprep.subr.mxu0 0.0
    %465 = vmatpush1.msra.mxu0 0.0
    %466 = vmatprep.subr.mxu0 0.0
    %467 = vmatpush1.msra.mxu0 0.0
    %468 = vmatprep.subr.mxu0 0.0
    %469 = vmatpush1.msra.mxu0 0.0
    %470 = vmatprep.subr.mxu0 0.0
    %471 = vmatpush1.msra.mxu0 0.0
    %472 = vmatprep.subr.mxu0 0.0
    %473 = vmatpush1.msra.mxu0 0.0
    %474 = vmatprep.subr.mxu0 0.0
    %475 = vmatpush1.msra.mxu0 0.0
    %476 = vmatprep.subr.mxu0 0.0
    %477 = vmatpush1.msra.mxu0 0.0
    %478 = vmatprep.subr.mxu0 0.0
    %479 = vmatpush1.msra.mxu0 0.0
    %480 = vmatprep.subr.mxu0 0.0
    %481 = vmatpush1.msra.mxu0 0.0
    %482 = vmatprep.subr.mxu0 0.0
    %483 = vmatpush1.msra.mxu0 0.0
    %484 = vmatprep.subr.mxu0 0.0
    %485 = vmatpush1.msra.mxu0 0.0
    %486 = vmatprep.subr.mxu0 0.0
    %487 = vmatpush1.msra.mxu0 0.0
    %488 = vmatprep.subr.mxu0 0.0
    %489 = vmatpush1.msra.mxu0 0.0
    %490 = vmatprep.subr.mxu0 0.0
    %491 = vmatpush1.msra.mxu0 0.0
    %492 = vmatprep.subr.mxu0 0.0
    %493 = vmatpush1.msra.mxu0 0.0
    %494 = vmatprep.subr.mxu0 0.0
    %495 = vmatpush1.msra.mxu0 0.0
    %496 = vmatprep.mubr.f32.mxu0 0.0
    %497 = vmatmul.mubr.f32.gmra.mrb[0].mxu0 %v427
    %v498 = vpop.f32.mrb[0].mxu0
    %v499 = vadd.f32 %v423, %v498
    %v500 = vpop.f32.mrb[0].mxu0
    %501 = vdwg.mxu0
    %502 = vst [vmem:[#allocation10] sm:$0xff] %v499
    // Predicated region
    $region46: #{tpu_custom_call.1} parent=1 // pred_check
      _
    $region47: #{tpu_custom_call.1} parent=1 // pred_check_branch
      %504 = sbr.rel (0) target = $region49
    $region48: #{tpu_custom_call.1} parent=1 // pred_region
      %s506 = ssub.s32 128, 128
      %507 = vsyncadd [#allocation4], %s506
      %s509 = sshll.u32 [#allocation10], 4
      %s510 = int_to_ptr.vmem [resolvable:$true] %s509
      %512 = dma.vmem_to_hbm [thread:$0]  %s510, 128, %s7, [#allocation4]
    $region49: #{tpu_custom_call.1} parent=1 // pred_fallthru
      _
    // Predicated region
    $region50: #{tpu_custom_call.1} parent=1 // pred_check
      _
    $region51: #{tpu_custom_call.1} parent=1 // pred_check_branch
      %514 = sbr.rel (0) target = $region53
    $region52: #{tpu_custom_call.1} parent=1 // pred_region
      %515 = dma.done [#allocation4], 128
    $region53: #{tpu_custom_call.1} parent=1 // pred_fallthru
      _
    %516 = vsyncpa [#allocation3], 1
    %517 = vsyncpa [#allocation6], 1
    %518 = vsyncpa [#allocation9], 1
    %519 = vsyncpa [#allocation4], 1

</llo_original>
